<compile_context>
chip_gen: v5e
topology: v5e:2x2
jax: 0.10.0
libtpu: 0.0.40
codegen_flags: <defaults>
</compile_context>

<pallas_src>
import numpy as np
import jax
import jax.numpy as jnp
from jax.experimental import pallas as pl
from jax.experimental.pallas import tpu as pltpu

_CHUNK = 256        # inner lane-chunk width (multiple of the 128-lane vreg width)
_MAX_BLOCK = 2048   # cap on the per-grid-step lane tile


# --------------------------------------------------------------------------
# Kernel: out[0, b] = sum_{i,j} G[i, j] * max(x[i, b], x[j, b])
# --------------------------------------------------------------------------
def _choquet_kernel(x_ref, g_ref, o_ref):
    """
    x_ref: (dim, block_b)     batch on lanes (lane-dense), f32
    g_ref: (dim*dim, chunk)   folded weights, lane-replicated, f32 (resident)
    o_ref: (1, block_b)       lane-dense output row
    """
    dim, block_b = x_ref.shape
    _, chunk = g_ref.shape
    g = g_ref[...]                                 # loaded once, stays in vregs

    # Inner chunk loop bounds the per-chunk live state to ~2 vregs even for
    # large block_b (no spills).  All slice offsets are static and
    # (8, 128)-tile aligned for dim == 8.
    for c in range(block_b // chunk):
        lo = c * chunk
        x_c = x_ref[:, lo:lo + chunk]              # (dim, chunk)
        # row j of maximum(...) is max(x_0, x_j); weight row-block 0 is G[0, :]
        acc = g[0:dim, :] * jnp.maximum(x_c[0:1, :], x_c)
        for i in range(1, dim):
            acc = acc + g[i * dim:(i + 1) * dim, :] * jnp.maximum(x_c[i:i + 1, :], x_c)
        # single cross-sublane reduce -> lane-dense (1, chunk) store
        o_ref[0:1, lo:lo + chunk] = jnp.sum(acc, axis=0, keepdims=True)


# --------------------------------------------------------------------------
# One-time weight transform (outside the per-forward hot path).
# --------------------------------------------------------------------------
def prepare_choquet_weights(weight, dim, chunk=_CHUNK):
    """Fold the (dim*dim,) fuzzy-measure weights into a lane-replicated G.

    Identity:
        sum_i w_i x_i + sum_{i<j} [Wmin_ij*min(x_i,x_j) + Wmax_ij*max(x_i,x_j)]
      = sum_{i,j} G[i,j] * max(x_i, x_j)
    with  G[i,j] = Wmax_ij - Wmin_ij                       (i<j)
          G[i,i] = w_i + sum_{pairs containing i} Wmin
    (because min(a,b) = a+b-max(a,b) and x_i = max(x_i, x_i)).

    Returned as a (dim*dim, chunk) f32 array, lane-replicated so the kernel's
    weight multiply needs no in-kernel lane broadcast.
    """
    n_pairs = dim * (dim - 1) // 2
    weight = weight.reshape(dim * dim).astype(jnp.float32)
    w_single = weight[:dim]
    w_min = weight[dim:dim + n_pairs]
    w_max = weight[dim + n_pairs:dim + 2 * n_pairs]

    # Static gather indices (same (i<j) ordering as torch.combinations).
    ii, jj = np.triu_indices(dim, k=1)
    gather_idx = np.full((dim, dim), n_pairs, dtype=np.int32)   # -> zero slot
    gather_idx[ii, jj] = np.arange(n_pairs, dtype=np.int32)
    gather_idx = jnp.asarray(gather_idx)

    w_min_pad = jnp.concatenate([w_min, jnp.zeros((1,), jnp.float32)])
    w_max_pad = jnp.concatenate([w_max, jnp.zeros((1,), jnp.float32)])
    W_min = jnp.take(w_min_pad, gather_idx, axis=0)             # (dim, dim) upper-tri
    W_max = jnp.take(w_max_pad, gather_idx, axis=0)

    s = jnp.sum(W_min, axis=1) + jnp.sum(W_min, axis=0)
    G = (W_max - W_min) + jnp.diag(w_single + s)
    g_col = G.reshape(dim * dim, 1)
    return jnp.tile(g_col, (1, chunk))                          # (dim*dim, chunk)


# --------------------------------------------------------------------------
# Forward: batched (B, dim) -> (B, 1); also accepts a single (dim,) vector.
# --------------------------------------------------------------------------
def _round_up(n, m):
    return ((n + m - 1) // m) * m


def choquet_2_add_forward(x, g_rep, dim, *, max_block=_MAX_BLOCK):
    squeeze = (x.ndim == 1)
    if squeeze:
        x = x.reshape(1, dim)
    B = x.shape[0]
    chunk = g_rep.shape[1]

    # Lane tile: large enough to amortize per-step grid overhead, but aiming
    # for >= 8 grid steps at large B so both v7x TensorCores get work.
    block_b = int(min(max_block, max(chunk, _round_up(-(-B // 8), chunk))))
    grid = (pl.cdiv(B, block_b),)

    # Feature-major, lane-dense layout.  (If the caller stores activations as
    # (dim, B) upstream, this transpose disappears entirely.)  No padding:
    # the ragged edge block is masked by Pallas.
    x_fm = x.astype(jnp.float32).T                               # (dim, B)

    out = pl.pallas_call(
        _choquet_kernel,
        out_shape=jax.ShapeDtypeStruct((1, B), jnp.float32),
        grid=grid,
        in_specs=[
            pl.BlockSpec((dim, block_b), lambda b: (0, b)),      # x tile
            pl.BlockSpec((dim * dim, chunk), lambda b: (0, 0)),  # resident weights
        ],
        out_specs=pl.BlockSpec((1, block_b), lambda b: (0, b)),
        compiler_params=pltpu.CompilerParams(
            dimension_semantics=("parallel",)),                  # megacore on v7x
    )(x_fm, g_rep)

    out = out[0, :].reshape(B, 1)
    if squeeze:
        out = out.reshape(1)      # matches the PyTorch (1,) output for a 1-D input
    return out


# --------------------------------------------------------------------------
# Weight init mimicking Choquet_2_add.__init__ (rand, clamp(0), normalize).
# --------------------------------------------------------------------------
def init_weight(key, dim):
    w = jax.random.uniform(key, (dim * dim,), dtype=jnp.float32)
    w = jnp.clip(w, 0.0, None)
    return w / jnp.sum(w)


# TODO(synk): get_mobius / get_mobius_matrix / importance_value are weight-analysis
# helpers (not part of forward) and are left out of the kernel path.

if __name__ == "__main__":
    dim = 8
    batch = 300        # deliberately not a multiple of 128/256: exercises ragged-edge masking

    key = jax.random.PRNGKey(0)
    k_w, k_x = jax.random.split(key)
    weight = init_weight(k_w, dim)
    x = jax.random.uniform(k_x, (batch, dim), dtype=jnp.float32)

    # one-time weight fold + lane replication (outside the per-forward hot path)
    g_rep = prepare_choquet_weights(weight, dim, chunk=_CHUNK)

    # batched kernel forward
    out = jax.block_until_ready(choquet_2_add_forward(x, g_rep, dim))

    # pure-JAX reference mirroring the PyTorch forward exactly (original weights)
    ii, jj = np.triu_indices(dim, k=1)
    mins = jnp.minimum(x[:, ii], x[:, jj])
    maxs = jnp.maximum(x[:, ii], x[:, jj])
    feat = jnp.concatenate([x, mins, maxs], axis=1)              # (B, dim*dim)
    ref = (feat @ weight).reshape(batch, 1)

    assert out.shape == (batch, 1)
    np.testing.assert_allclose(np.asarray(out), np.asarray(ref), rtol=1e-5, atol=1e-5)

    # single-vector interface (shape (1,) output, exactly like the PyTorch module)
    out1 = jax.block_until_ready(choquet_2_add_forward(x[0], g_rep, dim))
    assert out1.shape == (1,)
    np.testing.assert_allclose(np.asarray(out1), np.asarray(ref[0]), rtol=1e-5, atol=1e-5)

    print("KERNEL_OK")
</pallas_src>

<mosaic_0001>
module attributes {stable_mosaic.version = 11 : i64} {
  func.func @_choquet_kernel(%arg0: i32, %arg1: memref<8x256xf32, #tpu.memory_space<vmem>>, %arg2: memref<64x256xf32, #tpu.memory_space<vmem>>, %arg3: memref<1x256xf32, #tpu.memory_space<vmem>>) attributes {dimension_semantics = [#tpu.dimension_semantics<parallel>], iteration_bounds = array<i64: 2>, scalar_prefetch = 0 : i64, scratch_operands = 0 : i64, tpu.core_type = #tpu.core_type<tc>, window_params = [{transform_indices = @transform_0, window_bounds = array<i64: 8, 256>}, {pipeline_mode = #tpu.pipeline_mode<synchronous>, transform_indices = @transform_1, window_bounds = array<i64: 64, 256>}, {transform_indices = @transform_2, window_bounds = array<i64: 1, 256>}]} {
    %c0 = arith.constant 0 : index
    %c0_0 = arith.constant 0 : index
    %0 = vector.load %arg2[%c0, %c0_0] : memref<64x256xf32, #tpu.memory_space<vmem>>, vector<64x256xf32>
    %c0_1 = arith.constant 0 : index
    %c0_2 = arith.constant 0 : index
    %1 = vector.load %arg1[%c0_1, %c0_2] : memref<8x256xf32, #tpu.memory_space<vmem>>, vector<8x256xf32>
    %2 = vector.extract_strided_slice %0 {offsets = [0, 0], sizes = [8, 256], strides = [1, 1]} : vector<64x256xf32> to vector<8x256xf32>
    %3 = vector.extract_strided_slice %1 {offsets = [0, 0], sizes = [1, 256], strides = [1, 1]} : vector<8x256xf32> to vector<1x256xf32>
    %4 = vector.broadcast %3 : vector<1x256xf32> to vector<8x256xf32>
    %5 = arith.maximumf %4, %1 : vector<8x256xf32>
    %6 = arith.mulf %2, %5 : vector<8x256xf32>
    %7 = vector.extract_strided_slice %0 {offsets = [8, 0], sizes = [8, 256], strides = [1, 1]} : vector<64x256xf32> to vector<8x256xf32>
    %8 = vector.extract_strided_slice %1 {offsets = [1, 0], sizes = [1, 256], strides = [1, 1]} : vector<8x256xf32> to vector<1x256xf32>
    %9 = vector.broadcast %8 : vector<1x256xf32> to vector<8x256xf32>
    %10 = arith.maximumf %9, %1 : vector<8x256xf32>
    %11 = arith.mulf %7, %10 : vector<8x256xf32>
    %12 = arith.addf %6, %11 : vector<8x256xf32>
    %13 = vector.extract_strided_slice %0 {offsets = [16, 0], sizes = [8, 256], strides = [1, 1]} : vector<64x256xf32> to vector<8x256xf32>
    %14 = vector.extract_strided_slice %1 {offsets = [2, 0], sizes = [1, 256], strides = [1, 1]} : vector<8x256xf32> to vector<1x256xf32>
    %15 = vector.broadcast %14 : vector<1x256xf32> to vector<8x256xf32>
    %16 = arith.maximumf %15, %1 : vector<8x256xf32>
    %17 = arith.mulf %13, %16 : vector<8x256xf32>
    %18 = arith.addf %12, %17 : vector<8x256xf32>
    %19 = vector.extract_strided_slice %0 {offsets = [24, 0], sizes = [8, 256], strides = [1, 1]} : vector<64x256xf32> to vector<8x256xf32>
    %20 = vector.extract_strided_slice %1 {offsets = [3, 0], sizes = [1, 256], strides = [1, 1]} : vector<8x256xf32> to vector<1x256xf32>
    %21 = vector.broadcast %20 : vector<1x256xf32> to vector<8x256xf32>
    %22 = arith.maximumf %21, %1 : vector<8x256xf32>
    %23 = arith.mulf %19, %22 : vector<8x256xf32>
    %24 = arith.addf %18, %23 : vector<8x256xf32>
    %25 = vector.extract_strided_slice %0 {offsets = [32, 0], sizes = [8, 256], strides = [1, 1]} : vector<64x256xf32> to vector<8x256xf32>
    %26 = vector.extract_strided_slice %1 {offsets = [4, 0], sizes = [1, 256], strides = [1, 1]} : vector<8x256xf32> to vector<1x256xf32>
    %27 = vector.broadcast %26 : vector<1x256xf32> to vector<8x256xf32>
    %28 = arith.maximumf %27, %1 : vector<8x256xf32>
    %29 = arith.mulf %25, %28 : vector<8x256xf32>
    %30 = arith.addf %24, %29 : vector<8x256xf32>
    %31 = vector.extract_strided_slice %0 {offsets = [40, 0], sizes = [8, 256], strides = [1, 1]} : vector<64x256xf32> to vector<8x256xf32>
    %32 = vector.extract_strided_slice %1 {offsets = [5, 0], sizes = [1, 256], strides = [1, 1]} : vector<8x256xf32> to vector<1x256xf32>
    %33 = vector.broadcast %32 : vector<1x256xf32> to vector<8x256xf32>
    %34 = arith.maximumf %33, %1 : vector<8x256xf32>
    %35 = arith.mulf %31, %34 : vector<8x256xf32>
    %36 = arith.addf %30, %35 : vector<8x256xf32>
    %37 = vector.extract_strided_slice %0 {offsets = [48, 0], sizes = [8, 256], strides = [1, 1]} : vector<64x256xf32> to vector<8x256xf32>
    %38 = vector.extract_strided_slice %1 {offsets = [6, 0], sizes = [1, 256], strides = [1, 1]} : vector<8x256xf32> to vector<1x256xf32>
    %39 = vector.broadcast %38 : vector<1x256xf32> to vector<8x256xf32>
    %40 = arith.maximumf %39, %1 : vector<8x256xf32>
    %41 = arith.mulf %37, %40 : vector<8x256xf32>
    %42 = arith.addf %36, %41 : vector<8x256xf32>
    %43 = vector.extract_strided_slice %0 {offsets = [56, 0], sizes = [8, 256], strides = [1, 1]} : vector<64x256xf32> to vector<8x256xf32>
    %44 = vector.extract_strided_slice %1 {offsets = [7, 0], sizes = [1, 256], strides = [1, 1]} : vector<8x256xf32> to vector<1x256xf32>
    %45 = vector.broadcast %44 : vector<1x256xf32> to vector<8x256xf32>
    %46 = arith.maximumf %45, %1 : vector<8x256xf32>
    %47 = arith.mulf %43, %46 : vector<8x256xf32>
    %48 = arith.addf %42, %47 : vector<8x256xf32>
    %cst = arith.constant dense<0.000000e+00> : vector<256xf32>
    %49 = vector.multi_reduction <add>, %48, %cst [0] : vector<8x256xf32> to vector<256xf32>
    %50 = vector.shape_cast %49 : vector<256xf32> to vector<1x256xf32>
    %c0_3 = arith.constant 0 : index
    %c0_4 = arith.constant 0 : index
    %51 = vector.load %arg3[%c0_3, %c0_4] : memref<1x256xf32, #tpu.memory_space<vmem>>, vector<1x256xf32>
    tpu.vector_store %arg3[%c0_3, %c0_4], %50 {strides = array<i32>} : memref<1x256xf32, #tpu.memory_space<vmem>>, vector<1x256xf32>,
    return
  }
  func.func @transform_0(%arg0: i32) -> (i32, i32) {
    %c0_i32 = arith.constant 0 : i32
    %c0_i32_0 = arith.constant 0 : i32
    return %c0_i32, %arg0 : i32, i32
  }
  func.func @transform_1(%arg0: i32) -> (i32, i32) {
    %c0_i32 = arith.constant 0 : i32
    %c0_i32_0 = arith.constant 0 : i32
    %c0_i32_1 = arith.constant 0 : i32
    return %c0_i32, %c0_i32_0 : i32, i32
  }
  func.func @transform_2(%arg0: i32) -> (i32, i32) {
    %c0_i32 = arith.constant 0 : i32
    %c0_i32_0 = arith.constant 0 : i32
    return %c0_i32, %arg0 : i32, i32
  }
}

</mosaic_0001>

<llo_original>
// kernel: tpu_custom_call.1
$region0: #{tpu_custom_call.1}
  #allocation0 [shape = 'u32[]', space=smem, size = 0x4, offset = 0x4, fixed_abs, tag = 'smem constant byte address 0x4 - core index']
  #allocation1 [shape = 'u32[72,128]{1,0:T(1,128)}', space=vmem, size = 0x9000, scoped, tag = 'internal scratch']
  %s0 = inlined_call_operand.hbm [shape: f32[8,300], index: 0, kind: input, shape index: {}]
  %s1 = inlined_call_operand.hbm [shape: f32[64,256], index: 1, kind: input, shape index: {}]
  %s2 = inlined_call_operand.hbm [shape: f32[1,300], index: 2, kind: output, shape index: {}]
  %s3 = sld [smem:[#allocation0]]
  $region49: #{tpu_custom_call.1} parent=0
    _
  %s5 = ssub.s32 1, %s3
  %s6 = scalar_select 0, %s5, %s3
  $region1: #{tpu_custom_call.1} parent=0
    #allocation2 [shape = 'u8[16384]{0}', space=vmem, size = 0x4000, scoped, tag = 'input window, operand 0']
    #allocation3 [shape = 's32[2]{0}', space=sflag, size = 0x8, scoped, tag = 'scoped memory for tpu_custom_call.1']
    #allocation4 [shape = 's32[2]{0}', space=sflag, size = 0x8, scoped, tag = 'scoped memory for tpu_custom_call.1']
    #allocation5 [shape = 'u8[65536]{0}', space=vmem, size = 0x10000, scoped, tag = 'input window, operand 1, single buffered']
    #allocation6 [shape = 's32[1]{0}', space=sflag, size = 0x4, scoped, tag = 'scoped memory for tpu_custom_call.1']
    #allocation7 [shape = 'u8[2048]{0}', space=vmem, size = 0x800, scoped, tag = 'output window, operand 0']
    %7 = vsyncpa [#allocation3], 0
    %s8 = scalar_lea.sflag [#allocation3], 1
    %9 = vsyncpa %s8, 0
    %10 = vsyncpa [#allocation6], 0
    %11 = vsyncpa [#allocation4], 0
    %s12 = scalar_lea.sflag [#allocation4], 1
    %13 = vsyncpa %s12, 0
    loop: start=0, step=1, limit=4
    $region2: #{tpu_custom_call.1} parent=1 // loop_pre_header
      _
    $region3: #{tpu_custom_call.1} parent=1 // loop_header
      %s15 = sphi 0, %s19
      %p16 = scmp.ge.s32.totalorder %s15, 4
      %s25 = sphi 0, %s27
      %s28 = sphi 0, %s25
      %s29 = sphi 0, %s28
      %s45 = sphi 0, %s29
      %s49 = sphi 0, %s49
      %s51 = sphi 0, %s49
      %s52 = sphi 0, %s51
      %s66 = sphi 0, %s52
      %s72 = sphi 0, %s74
      %s75 = sphi 0, %s72
      %s76 = sphi 0, %s75
      %s92 = sphi 0, %s76
    $region4: #{tpu_custom_call.1} parent=1 // loop_header_branch
      %18 = sbr.rel (%p16) target = $region8
    $region5: #{tpu_custom_call.1} parent=1 // loop_body
      %s20 = ssub.s32 %s15, 1
      %s21 = ssub.s32 %s15, 2
      %s22 = sadd.s32 %s15, 1
      %s23 = ssub.s32 %s15, %s22
      %p24 = scmp.eq.s32.totalorder %s23, 0
      %s26 = sadd.s32 %s25, 1
      %s27 = scalar_select %p24, %s25, %s26
      %p30 = pneg %p24
      %p31 = scmp.eq.s32.totalorder %s15, 1
      %p32 = por %p30, %p31
      %p33 = scmp.ne.s32.totalorder %s25, %s28
      %p34 = scmp.eq.s32.totalorder %s15, 0
      %p35 = por %p33, %p34
      %p36 = scmp.ne.s32.totalorder %s25, %s28
      %p37 = scmp.eq.s32.totalorder %s20, 1
      %p38 = por %p36, %p37
      %p39 = scmp.ne.s32.totalorder %s28, %s29
      %p40 = scmp.eq.s32.totalorder %s20, 0
      %p41 = por %p39, %p40
      %p42 = scmp.ne.s32.totalorder %s28, %s29
      %p43 = scmp.eq.s32.totalorder %s21, 1
      %p44 = por %p42, %p43
      %p46 = scmp.ne.s32.totalorder %s29, %s45
      %p47 = scmp.eq.s32.totalorder %s21, 0
      %p48 = por %p46, %p47
      %s50 = sadd.s32 %s49, 1
      %p53 = scmp.eq.s32.totalorder %s15, 1
      %p54 = scmp.ne.s32.totalorder %s49, %s51
      %p55 = scmp.eq.s32.totalorder %s15, 0
      %p56 = por %p54, %p55
      %p57 = scmp.ne.s32.totalorder %s49, %s51
      %p58 = scmp.eq.s32.totalorder %s20, 1
      %p59 = por %p57, %p58
      %p60 = scmp.ne.s32.totalorder %s51, %s52
      %p61 = scmp.eq.s32.totalorder %s20, 0
      %p62 = por %p60, %p61
      %p63 = scmp.ne.s32.totalorder %s51, %s52
      %p64 = scmp.eq.s32.totalorder %s21, 1
      %p65 = por %p63, %p64
      %p67 = scmp.ne.s32.totalorder %s52, %s66
      %p68 = scmp.eq.s32.totalorder %s21, 0
      %p69 = por %p67, %p68
      %s70 = ssub.s32 %s15, %s22
      %p71 = scmp.eq.s32.totalorder %s70, 0
      %s73 = sadd.s32 %s72, 1
      %s74 = scalar_select %p71, %s72, %s73
      %p77 = pneg %p71
      %p78 = scmp.eq.s32.totalorder %s15, 1
      %p79 = por %p77, %p78
      %p80 = scmp.ne.s32.totalorder %s72, %s75
      %p81 = scmp.eq.s32.totalorder %s15, 0
      %p82 = por %p80, %p81
      %p83 = scmp.ne.s32.totalorder %s72, %s75
      %p84 = scmp.eq.s32.totalorder %s20, 1
      %p85 = por %p83, %p84
      %p86 = scmp.ne.s32.totalorder %s75, %s76
      %p87 = scmp.eq.s32.totalorder %s20, 0
      %p88 = por %p86, %p87
      %p89 = scmp.ne.s32.totalorder %s75, %s76
      %p90 = scmp.eq.s32.totalorder %s21, 1
      %p91 = por %p89, %p90
      %p93 = scmp.ne.s32.totalorder %s76, %s92
      %p94 = scmp.eq.s32.totalorder %s21, 0
      %p95 = por %p93, %p94
      %p96 = scmp.le.s32.totalorder 1, %s15
      %p97 = scmp.lt.s32.totalorder %s15, 3
      %p98 = pnand %p96, %p97
      %p99 = pneg %p98
      // Predicated region
      $region9: #{tpu_custom_call.1} parent=5 // pred_check
        _
      $region10: #{tpu_custom_call.1} parent=5 // pred_check_branch
        %101 = sbr.rel (%p98) target = $region12
      $region11: #{tpu_custom_call.1} parent=5 // pred_region
        %s102 = ssub.s32 %s15, 1
        // Predicated region
        $region13: #{tpu_custom_call.1} parent=11 // pred_check
          %p103 = pneg %p62
        $region14: #{tpu_custom_call.1} parent=11 // pred_check_branch
          %105 = sbr.rel (%p103) target = $region16
        $region15: #{tpu_custom_call.1} parent=11 // pred_region
          %107 = vsyncadd [#allocation6], 0
          %s108 = sshll.u32 %s1, 4
          %s109 = int_to_ptr.hbm [resolvable:$true] %s108
          %s110 = sshll.u32 [#allocation5], 4
          %s111 = int_to_ptr.vmem [resolvable:$true] %s110
          %116 = dma.hbm_to_vmem [thread:$0]  %s109, 2048, %s111, [#allocation6], 256, 256, 16
        $region16: #{tpu_custom_call.1} parent=11 // pred_fallthru
          _
      $region12: #{tpu_custom_call.1} parent=5 // pred_fallthru
        _
      %p117 = scmp.lt.s32.totalorder %s15, 2
      // Predicated region
      $region17: #{tpu_custom_call.1} parent=5 // pred_check
        %p118 = pneg %p117
      $region18: #{tpu_custom_call.1} parent=5 // pred_check_branch
        %120 = sbr.rel (%p118) target = $region20
      $region19: #{tpu_custom_call.1} parent=5 // pred_region
        // Predicated region
        $region21: #{tpu_custom_call.1} parent=19 // pred_check
          %p121 = pneg %p35
        $region22: #{tpu_custom_call.1} parent=19 // pred_check_branch
          %123 = sbr.rel (%p121) target = $region24
        $region23: #{tpu_custom_call.1} parent=19 // pred_region
          %s124 = sand.u32 %s25, 1
          %s125 = scalar_lea.sflag [#allocation3], %s124
          %s126 = sand.u32 %s25, 1
          %s127 = smul.addr %s126, 16
          %s128 = scalar_lea.vmem [#allocation2], %s127
          %s129 = smul.u32 2, %s15
          %s130 = ssub.s32 3, %s129
          %p131 = scmp.lt.s32.totalorder %s130, 2
          %s132 = scalar_select %p131, %s130, 2
          %s133 = smul.u32 8, %s132
          %s134 = ssub.s32 16, %s133
          %s135 = sshll.u32 %s134, 4
          %136 = vsyncadd %s125, %s135
          %p137 = scmp.ne.s32.totalorder 0, %s133
          %s138 = smul.addr %s129, 8
          %s139 = scalar_lea.hbm %s0, %s138
          %s140 = smul.u32 %s132, 8
          %s141 = sshll.u32 %s140, 4
          %s142 = sshll.u32 %s139, 4
          %s143 = int_to_ptr.hbm [resolvable:$true] %s142
          %s144 = sshll.u32 %s128, 4
          %s145 = int_to_ptr.vmem [resolvable:$true] %s144
          %147 = dma.hbm_to_vmem [thread:$0]  (%p137), %s143, %s141, %s145, %s125
        $region24: #{tpu_custom_call.1} parent=19 // pred_fallthru
          _
      $region20: #{tpu_custom_call.1} parent=5 // pred_fallthru
        _
      %p148 = scmp.le.s32.totalorder 1, %s15
      %p149 = scmp.lt.s32.totalorder %s15, 3
      %p150 = pnand %p148, %p149
      %p151 = pneg %p150
      // Predicated region
      $region25: #{tpu_custom_call.1} parent=5 // pred_check
        _
      $region26: #{tpu_custom_call.1} parent=5 // pred_check_branch
        %153 = sbr.rel (%p150) target = $region28
      $region27: #{tpu_custom_call.1} parent=5 // pred_region
        %s154 = ssub.s32 %s15, 1
        %s155 = sand.u32 %s28, 1
        %s156 = scalar_lea.sflag [#allocation3], %s155
        %s157 = sand.u32 %s28, 1
        %s158 = smul.addr %s157, 16
        %s159 = scalar_lea.vmem [#allocation2], %s158
        // Predicated region
        $region29: #{tpu_custom_call.1} parent=27 // pred_check
          %p160 = pneg %p41
        $region30: #{tpu_custom_call.1} parent=27 // pred_check_branch
          %162 = sbr.rel (%p160) target = $region32
        $region31: #{tpu_custom_call.1} parent=27 // pred_region
          %164 = dma.done %s156, 256
        $region32: #{tpu_custom_call.1} parent=27 // pred_fallthru
          _
        // Predicated region
        $region33: #{tpu_custom_call.1} parent=27 // pred_check
          %p165 = pneg %p62
        $region34: #{tpu_custom_call.1} parent=27 // pred_check_branch
          %167 = sbr.rel (%p165) target = $region36
        $region35: #{tpu_custom_call.1} parent=27 // pred_region
          %169 = dma.done [#allocation6], 2048
        $region36: #{tpu_custom_call.1} parent=27 // pred_fallthru
          _
        %s170 = sand.u32 %s28, 1
        %s171 = scalar_lea.sflag [#allocation3], %s170
        %s172 = sand.u32 %s28, 1
        %s173 = smul.addr %s172, 16
        %s174 = scalar_lea.vmem [#allocation2], %s173
        %p175 = pneg %p41
        %p176 = pneg %p38
        %p177 = pneg %p62
        %p178 = pneg %p59
        %p179 = pneg %p88
        %p180 = pneg %p85
        %s181 = sand.u32 %s75, 1
        %s182 = scalar_lea.sflag [#allocation4], %s181
        %s183 = sand.u32 %s75, 1
        %s184 = smul.addr %s183, 2
        %s185 = scalar_lea.vmem [#allocation7], %s184
        %s186 = smul.u32 2, %s20
        %s187 = ssub.s32 3, %s186
        %p188 = scmp.lt.s32.totalorder %s187, 2
        %s189 = scalar_select %p188, %s187, 2
        %s190 = smul.u32 8, %s189
        %s191 = smul.u32 2, %s20
        %s192 = ssub.s32 3, %s191
        %p193 = scmp.lt.s32.totalorder %s192, 2
        %s194 = scalar_select %p193, %s192, 2
        %v195 = vld [vmem:[#allocation5] sm:$0xff]
        %v196 = vld [vmem:[#allocation5 + $0x8] sm:$0xff]
        %v197 = vld [vmem:[#allocation5 + $0x10] sm:$0xff]
        %v198 = vld [vmem:[#allocation5 + $0x18] sm:$0xff]
        %v199 = vld [vmem:[#allocation5 + $0x20] sm:$0xff]
        %v200 = vld [vmem:[#allocation5 + $0x28] sm:$0xff]
        %v201 = vld [vmem:[#allocation5 + $0x30] sm:$0xff]
        %v202 = vld [vmem:[#allocation5 + $0x38] sm:$0xff]
        %v203 = vld [vmem:[#allocation5 + $0x40] sm:$0xff]
        %v204 = vld [vmem:[#allocation5 + $0x48] sm:$0xff]
        %v205 = vld [vmem:[#allocation5 + $0x50] sm:$0xff]
        %v206 = vld [vmem:[#allocation5 + $0x58] sm:$0xff]
        %v207 = vld [vmem:[#allocation5 + $0x60] sm:$0xff]
        %v208 = vld [vmem:[#allocation5 + $0x68] sm:$0xff]
        %v209 = vld [vmem:[#allocation5 + $0x70] sm:$0xff]
        %v210 = vld [vmem:[#allocation5 + $0x78] sm:$0xff]
        %v211 = vld [vmem:[%s159] sm:$0xff]
        %v212 = vld [vmem:[%s159 + $0x8] sm:$0xff]
        %v213 = vperm.slane %v211, 0
        %v214 = vperm.slane %v212, 0
        %v215 = vmax.f32 %v213, %v211
        %v216 = vmax.f32 %v214, %v212
        %v217 = vmul.f32 %v195, %v215
        %v218 = vmul.f32 %v196, %v216
        %v219 = vperm.slane %v211, 1
        %v220 = vperm.slane %v212, 1
        %v221 = vmax.f32 %v219, %v211
        %v222 = vmax.f32 %v220, %v212
        %v223 = vmul.f32 %v197, %v221
        %v224 = vmul.f32 %v198, %v222
        %v225 = vadd.f32 %v217, %v223
        %v226 = vadd.f32 %v218, %v224
        %v227 = vperm.slane %v211, 2
        %v228 = vperm.slane %v212, 2
        %v229 = vmax.f32 %v227, %v211
        %v230 = vmax.f32 %v228, %v212
        %v231 = vmul.f32 %v199, %v229
        %v232 = vmul.f32 %v200, %v230
        %v233 = vadd.f32 %v225, %v231
        %v234 = vadd.f32 %v226, %v232
        %v235 = vperm.slane %v211, 3
        %v236 = vperm.slane %v212, 3
        %v237 = vmax.f32 %v235, %v211
        %v238 = vmax.f32 %v236, %v212
        %v239 = vmul.f32 %v201, %v237
        %v240 = vmul.f32 %v202, %v238
        %v241 = vadd.f32 %v233, %v239
        %v242 = vadd.f32 %v234, %v240
        %v243 = vperm.slane %v211, 4
        %v244 = vperm.slane %v212, 4
        %v245 = vmax.f32 %v243, %v211
        %v246 = vmax.f32 %v244, %v212
        %v247 = vmul.f32 %v203, %v245
        %v248 = vmul.f32 %v204, %v246
        %v249 = vadd.f32 %v241, %v247
        %v250 = vadd.f32 %v242, %v248
        %v251 = vperm.slane %v211, 5
        %v252 = vperm.slane %v212, 5
        %v253 = vmax.f32 %v251, %v211
        %v254 = vmax.f32 %v252, %v212
        %v255 = vmul.f32 %v205, %v253
        %v256 = vmul.f32 %v206, %v254
        %v257 = vadd.f32 %v249, %v255
        %v258 = vadd.f32 %v250, %v256
        %v259 = vperm.slane %v211, 6
        %v260 = vperm.slane %v212, 6
        %v261 = vmax.f32 %v259, %v211
        %v262 = vmax.f32 %v260, %v212
        %v263 = vmul.f32 %v207, %v261
        %v264 = vmul.f32 %v208, %v262
        %v265 = vadd.f32 %v257, %v263
        %v266 = vadd.f32 %v258, %v264
        %v267 = vperm.slane %v211, 7
        %v268 = vperm.slane %v212, 7
        %v269 = vmax.f32 %v267, %v211
        %v270 = vmax.f32 %v268, %v212
        %v271 = vmul.f32 %v209, %v269
        %v272 = vmul.f32 %v210, %v270
        %v273 = vadd.f32 %v265, %v271
        %v274 = vadd.f32 %v266, %v272
        %v275 = vrot.slane %v273, 4
        %v276 = vadd.f32 %v273, %v275
        %v277 = vrot.slane %v276, 2
        %v278 = vadd.f32 %v276, %v277
        %v279 = vrot.slane %v278, 1
        %v280 = vadd.f32 %v278, %v279
        %v281 = vrot.slane %v274, 4
        %v282 = vadd.f32 %v274, %v281
        %v283 = vrot.slane %v282, 2
        %v284 = vadd.f32 %v282, %v283
        %v285 = vrot.slane %v284, 1
        %v286 = vadd.f32 %v284, %v285
        %v289 = vrot.slane %v286, 7
        %vm290 = vcmask 1040384
        %v291 = vsel %vm290, %v280, %v289
        %v293 = vlaneseq
        %vm294 = vcmp.ge.s32.totalorder %v293, 0
        %vm295 = vcmp.lt.s32.totalorder %v293, 256
        %vm296 = vmand %vm294, %vm295
        %297 = vst.msk [vmem:[%s185] sm:$0x3] %vm296, %v291
        %s298 = sand.u32 %s75, 1
        %s299 = scalar_lea.sflag [#allocation4], %s298
        %s300 = sand.u32 %s75, 1
        %s301 = smul.addr %s300, 2
        %s302 = scalar_lea.vmem [#allocation7], %s301
        // Predicated region
        $region37: #{tpu_custom_call.1} parent=27 // pred_check
          %p303 = pneg %p85
        $region38: #{tpu_custom_call.1} parent=27 // pred_check_branch
          %305 = sbr.rel (%p303) target = $region40
        $region39: #{tpu_custom_call.1} parent=27 // pred_region
          %s306 = smul.u32 2, %s20
          %s307 = ssub.s32 3, %s306
          %p308 = scmp.lt.s32.totalorder %s307, 2
          %s309 = scalar_select %p308, %s307, 2
          %s310 = ssub.s32 2, %s309
          %s311 = sshll.u32 %s310, 4
          %312 = vsyncadd %s299, %s311
          %p313 = scmp.ne.s32.totalorder 0, %s309
          %s314 = scalar_lea.hbm %s2, %s306
          %s315 = sshll.u32 %s309, 4
          %s316 = sshll.u32 %s302, 4
          %s317 = int_to_ptr.vmem [resolvable:$true] %s316
          %s318 = sshll.u32 %s314, 4
          %s319 = int_to_ptr.hbm [resolvable:$true] %s318
          %321 = dma.vmem_to_hbm [thread:$0]  (%p313), %s317, %s315, %s319, %s299
        $region40: #{tpu_custom_call.1} parent=27 // pred_fallthru
          _
      $region28: #{tpu_custom_call.1} parent=5 // pred_fallthru
        _
      %p322 = scmp.le.s32.totalorder 2, %s15
      // Predicated region
      $region41: #{tpu_custom_call.1} parent=5 // pred_check
        %p323 = pneg %p322
      $region42: #{tpu_custom_call.1} parent=5 // pred_check_branch
        %325 = sbr.rel (%p323) target = $region44
      $region43: #{tpu_custom_call.1} parent=5 // pred_region
        %s326 = ssub.s32 %s15, 2
        // Predicated region
        $region45: #{tpu_custom_call.1} parent=43 // pred_check
          %p327 = pneg %p91
        $region46: #{tpu_custom_call.1} parent=43 // pred_check_branch
          %329 = sbr.rel (%p327) target = $region48
        $region47: #{tpu_custom_call.1} parent=43 // pred_region
          %s330 = sand.u32 %s76, 1
          %s331 = scalar_lea.sflag [#allocation4], %s330
          %s332 = sand.u32 %s76, 1
          %s333 = smul.addr %s332, 2
          %s334 = scalar_lea.vmem [#allocation7], %s333
          %336 = dma.done %s331, 32
        $region48: #{tpu_custom_call.1} parent=43 // pred_fallthru
          _
      $region44: #{tpu_custom_call.1} parent=5 // pred_fallthru
        _
    $region6: #{tpu_custom_call.1} parent=1 // loop_footer
      %s19 = sadd.s32 1, %s15
    $region7: #{tpu_custom_call.1} parent=1 // loop_footer_branch
      %14 = sbr.rel target = $region3
    $region8: #{tpu_custom_call.1} parent=1 // loop_exit
      _
    %337 = vsyncpa [#allocation3], 1
    %s338 = scalar_lea.sflag [#allocation3], 1
    %339 = vsyncpa %s338, 1
    %340 = vsyncpa [#allocation6], 1
    %341 = vsyncpa [#allocation4], 1
    %s342 = scalar_lea.sflag [#allocation4], 1
    %343 = vsyncpa %s342, 1

</llo_original>
